<compile_context>
chip_gen: v6e
topology: v6e:2x2x1
jax: 0.10.0
libtpu: 0.0.40
codegen_flags: <defaults>
</compile_context>

<pallas_src>
import jax
import jax.numpy as jnp
from jax.experimental import pallas as pl
from jax.experimental.pallas import tpu as pltpu

_LANES = 128
_MAX_TILE_ROWS = 512   # 512 x 128 x 4 B = 256 KiB per f32 tile; multiple of 8/16/32.


def _round_up(n: int, m: int) -> int:
    return ((n + m - 1) // m) * m


def _copy_kernel(x_ref, o_ref):
    # Pure data movement: one unmasked, lane-dense vld/vst per vreg of the tile.
    o_ref[...] = x_ref[...]


def _copy_pallas(slab: jax.Array, tile_r: int) -> jax.Array:
    """Tiled, pipelined copy of a (rows, 128) slab in its native dtype."""
    rows, lanes = slab.shape
    return pl.pallas_call(
        _copy_kernel,
        out_shape=jax.ShapeDtypeStruct((rows, lanes), slab.dtype),
        grid=(rows // tile_r,),
        in_specs=[pl.BlockSpec((tile_r, lanes), lambda i: (i, 0))],
        out_specs=pl.BlockSpec((tile_r, lanes), lambda i: (i, 0)),
        compiler_params=pltpu.CompilerParams(
            dimension_semantics=("parallel",)),   # shards across v7x's 2 TCs; free on v5e/v6e
    )(slab)


class CopyModel:
    """JAX/Pallas port of dqm CopyModel."""

    def __init__(self):
        self.prev_label = None   # exactly what update() received
        self._slab = None        # dense (rows, 128) view, built once in update()
        self._shape = None
        self._size = None
        self._tile_r = None

    def update(self, x):
        x = jnp.asarray(x)
        self.prev_label = x
        self._shape = x.shape
        self._size = int(x.size)

        # Hoisted out of forward(): build the sublane/lane-dense slab once, in
        # the label's native dtype (no f32 round trip).
        itemsize = jnp.dtype(x.dtype).itemsize
        sub = {4: 8, 2: 16, 1: 32}.get(itemsize, 8)   # (sub, 128) tiling per dtype
        rows = -(-max(self._size, 1) // _LANES)
        rows = _round_up(rows, sub)
        if rows > _MAX_TILE_ROWS:
            rows = _round_up(rows, _MAX_TILE_ROWS)
            self._tile_r = _MAX_TILE_ROWS
        else:
            self._tile_r = rows                        # single full-array block

        flat = x.reshape(-1)
        pad = rows * _LANES - self._size
        if pad:
            flat = jnp.pad(flat, (0, pad))
        self._slab = flat.reshape(rows, _LANES)

    def forward(self, x) -> dict:
        batch = x.shape[0]
        if self._slab is None:
            # Zero path: torch.randint(0, 1, ...) is always 0. A plain XLA
            # broadcast-of-zero is strictly cheaper than any kernel launch.
            logits = jnp.zeros((batch, 1), jnp.float32)
        else:
            out = _copy_pallas(self._slab, self._tile_r)
            if self._size == out.size:
                logits = out.reshape(self._shape)                  # metadata-only
            else:
                logits = out.reshape(-1)[: self._size].reshape(self._shape)
        # TODO(synk): the None/non-None branch mirrors the PyTorch module's
        # Python-level state; inside jit/scan the stored-label shape change would
        # need a fixed layout and a traced flag instead.
        return {"logits": logits}


if __name__ == "__main__":
    key = jax.random.PRNGKey(0)
    kx, kl = jax.random.split(key)

    # Small NCHW input, consistent with a classification model's forward.
    x = jax.random.normal(kx, (2, 4, 16, 16), dtype=jnp.float32)

    model = CopyModel()

    # First call: prev_label is None -> zeros of shape (B, 1).
    out0 = jax.block_until_ready(model.forward(x)["logits"])
    assert out0.shape == (2, 1)
    assert bool(jnp.all(out0 == 0.0))

    # After update with integer labels: forward returns them exactly, native dtype.
    labels = jax.random.randint(kl, (2, 1), 0, 5, dtype=jnp.int32)
    model.update(labels)
    out1 = jax.block_until_ready(model.forward(x)["logits"])
    assert out1.shape == (2, 1) and out1.dtype == jnp.int32
    assert bool(jnp.all(out1 == labels))

    # PyTorch semantics: update(x) with the NCHW input returns it as-is.
    model.update(x)
    out2 = jax.block_until_ready(model.forward(x)["logits"])
    assert out2.shape == x.shape and out2.dtype == x.dtype
    assert bool(jnp.all(out2 == x))

    print("KERNEL_OK")
</pallas_src>

<mosaic_0001>
module attributes {stable_mosaic.version = 11 : i64} {
  func.func @_copy_kernel(%arg0: i32, %arg1: memref<8x128xi32, #tpu.memory_space<vmem>>, %arg2: memref<8x128xi32, #tpu.memory_space<vmem>>) attributes {dimension_semantics = [#tpu.dimension_semantics<parallel>], iteration_bounds = array<i64: 1>, scalar_prefetch = 0 : i64, scratch_operands = 0 : i64, tpu.core_type = #tpu.core_type<tc>, window_params = [{transform_indices = @transform_0, window_bounds = array<i64: 8, 128>}, {transform_indices = @transform_1, window_bounds = array<i64: 8, 128>}]} {
    %c0 = arith.constant 0 : index
    %c0_0 = arith.constant 0 : index
    %0 = vector.load %arg1[%c0, %c0_0] : memref<8x128xi32, #tpu.memory_space<vmem>>, vector<8x128xi32>
    %c0_1 = arith.constant 0 : index
    %c0_2 = arith.constant 0 : index
    %1 = vector.load %arg2[%c0_1, %c0_2] : memref<8x128xi32, #tpu.memory_space<vmem>>, vector<8x128xi32>
    tpu.vector_store %arg2[%c0_1, %c0_2], %0 {strides = array<i32>} : memref<8x128xi32, #tpu.memory_space<vmem>>, vector<8x128xi32>,
    return
  }
  func.func @transform_0(%arg0: i32) -> (i32, i32) {
    %c0_i32 = arith.constant 0 : i32
    %c0_i32_0 = arith.constant 0 : i32
    return %arg0, %c0_i32 : i32, i32
  }
  func.func @transform_1(%arg0: i32) -> (i32, i32) {
    %c0_i32 = arith.constant 0 : i32
    %c0_i32_0 = arith.constant 0 : i32
    return %arg0, %c0_i32 : i32, i32
  }
}

</mosaic_0001>

<llo_original>
// kernel: tpu_custom_call.1
$region0: #{tpu_custom_call.1}
  #allocation0 [shape = 'u32[]', space=smem, size = 0x4, offset = 0x4, fixed_abs, tag = 'smem constant byte address 0x4 - core index']
  #allocation1 [shape = 'u32[144,128]{1,0:T(1,128)}', space=vmem, size = 0x12000, scoped, tag = 'internal scratch']
  %s0 = inlined_call_operand.hbm [shape: s32[8,128], index: 0, kind: input, shape index: {}]
  %s1 = inlined_call_operand.hbm [shape: s32[8,128], index: 1, kind: output, shape index: {}]
  %s2 = sld [smem:[#allocation0]]
  $region18: #{tpu_custom_call.1} parent=0
    _
  %s4 = ssub.s32 1, %s2
  %s5 = scalar_select 0, %s4, %s2
  $region1: #{tpu_custom_call.1} parent=0
    #allocation2 [shape = 'u8[4096]{0}', space=vmem, size = 0x1000, scoped, tag = 'input window, operand 0, single buffered']
    #allocation3 [shape = 's32[1]{0}', space=sflag, size = 0x4, scoped, tag = 'scoped memory for tpu_custom_call.1']
    #allocation4 [shape = 's32[1]{0}', space=sflag, size = 0x4, scoped, tag = 'scoped memory for tpu_custom_call.1']
    #allocation5 [shape = 'u8[4096]{0}', space=vmem, size = 0x1000, scoped, tag = 'output window, operand 0, single buffered']
    %6 = vsyncpa [#allocation3], 0
    %7 = vsyncpa [#allocation4], 0
    // Predicated region
    $region2: #{tpu_custom_call.1} parent=1 // pred_check
      _
    $region3: #{tpu_custom_call.1} parent=1 // pred_check_branch
      %9 = sbr.rel (0) target = $region5
    $region4: #{tpu_custom_call.1} parent=1 // pred_region
      %s11 = ssub.s32 128, 128
      %12 = vsyncadd [#allocation3], %s11
      %s14 = sshll.u32 [#allocation2], 4
      %s15 = int_to_ptr.vmem [resolvable:$true] %s14
      %17 = dma.hbm_to_vmem [thread:$0]  %s0, 128, %s15, [#allocation3]
    $region5: #{tpu_custom_call.1} parent=1 // pred_fallthru
      _
    // Predicated region
    $region6: #{tpu_custom_call.1} parent=1 // pred_check
      _
    $region7: #{tpu_custom_call.1} parent=1 // pred_check_branch
      %19 = sbr.rel (0) target = $region9
    $region8: #{tpu_custom_call.1} parent=1 // pred_region
      %20 = dma.done [#allocation3], 128
    $region9: #{tpu_custom_call.1} parent=1 // pred_fallthru
      _
    %v21 = vld [vmem:[#allocation2] sm:$0xff]
    %22 = vst [vmem:[#allocation5] sm:$0xff] %v21
    // Predicated region
    $region10: #{tpu_custom_call.1} parent=1 // pred_check
      _
    $region11: #{tpu_custom_call.1} parent=1 // pred_check_branch
      %24 = sbr.rel (0) target = $region13
    $region12: #{tpu_custom_call.1} parent=1 // pred_region
      %s26 = ssub.s32 128, 128
      %27 = vsyncadd [#allocation4], %s26
      %s29 = sshll.u32 [#allocation5], 4
      %s30 = int_to_ptr.vmem [resolvable:$true] %s29
      %32 = dma.vmem_to_hbm [thread:$0]  %s30, 128, %s1, [#allocation4]
    $region13: #{tpu_custom_call.1} parent=1 // pred_fallthru
      _
    // Predicated region
    $region14: #{tpu_custom_call.1} parent=1 // pred_check
      _
    $region15: #{tpu_custom_call.1} parent=1 // pred_check_branch
      %34 = sbr.rel (0) target = $region17
    $region16: #{tpu_custom_call.1} parent=1 // pred_region
      %35 = dma.done [#allocation4], 128
    $region17: #{tpu_custom_call.1} parent=1 // pred_fallthru
      _
    %36 = vsyncpa [#allocation3], 1
    %37 = vsyncpa [#allocation4], 1

</llo_original>
